<compile_context>
chip_gen: v6e
topology: v6e:2x2x1
jax: 0.10.0
libtpu: 0.0.40
codegen_flags: <defaults>
</compile_context>

<pallas_src>
import functools

import jax
import jax.numpy as jnp
from jax.experimental import pallas as pl
from jax.experimental.pallas import tpu as pltpu


def _round_up(v, m):
    return ((v + m - 1) // m) * m


def _linear_kernel(x_ref, w_ref, b_ref, o_ref):
    """One (TM, TN) output tile: single-shot MXU matmul + f32 bias epilogue."""
    acc = jnp.dot(x_ref[...], w_ref[...], preferred_element_type=jnp.float32)
    o_ref[...] = (acc + b_ref[...].astype(jnp.float32)).astype(o_ref.dtype)


def _select_plan(M, K, N, in_itemsize, out_itemsize, sublane):
    """Static, generation-aware tile / VMEM plan."""
    try:
        vmem_cap = int(pltpu.get_tpu_info().vmem_capacity_bytes)
    except Exception:  # pragma: no cover - conservative fallback
        vmem_cap = 64 << 20
    # ~96 MB scoped VMEM on 128 MiB parts (v5e/v6e), ~48 MB on v7x (64 MiB/TC).
    vmem_limit = min((vmem_cap * 3) // 4, 100 << 20)
    budget = (vmem_limit * 17) // 20  # headroom for compiler scratch

    # N tile: whole weight resident when its (double-buffered) block fits
    # comfortably; otherwise shrink tn in lane-aligned steps.
    np_full = _round_up(N, 128)
    tn = np_full
    while tn > 128 and 2 * K * tn * in_itemsize > budget // 2:
        tn = max(128, _round_up(tn // 2, 128))
    np_pad = _round_up(N, tn)

    w_bytes = 2 * K * tn * in_itemsize + 2 * tn * 4  # W + bias (double-buffered)

    # M tile: as large as fits (x tile + out tile double-buffered), sublane-
    # aligned for the packed compute dtype.
    tm = _round_up(min(1024, _round_up(M, sublane)), sublane)

    def x_out_bytes(t):
        return 2 * t * K * in_itemsize + 2 * t * tn * out_itemsize

    while tm > sublane and w_bytes + x_out_bytes(tm) > budget:
        tm = max(sublane, _round_up(tm // 2, sublane))

    # Make sure the (parallel) M axis has >=2 blocks so both v7x TensorCores
    # get work; harmless (<1 extra grid step) on single-TC chips.
    tm = min(tm, max(sublane, _round_up(pl.cdiv(M, 2), sublane)))
    return tm, tn, np_pad, vmem_limit


@functools.partial(
    jax.jit,
    static_argnames=("tm", "tn", "np_pad", "n_out", "vmem_limit", "compute_dtype"),
)
def _linear_pallas(x, w_t, b, *, tm, tn, np_pad, n_out, vmem_limit, compute_dtype):
    M, K = x.shape
    out_dtype = x.dtype

    if compute_dtype is not None and x.dtype != compute_dtype:
        x = x.astype(compute_dtype)
    if compute_dtype is not None and w_t.dtype != compute_dtype:
        w_t = w_t.astype(compute_dtype)  # no-op when pre-cast in __init__

    # Lane-pad weight / bias (no-op when pre-padded in __init__).
    if w_t.shape[1] != np_pad:
        w_t = jnp.pad(w_t, ((0, 0), (0, np_pad - w_t.shape[1])))
    if b.shape[1] != np_pad:
        b = jnp.pad(b, ((0, 0), (0, np_pad - b.shape[1])))

    # N outermost so the weight block index is constant across all M steps
    # (W crosses HBM once); M edge block may be partial (no x padding).
    grid = (np_pad // tn, pl.cdiv(M, tm))

    bytes_accessed = (
        M * K * x.dtype.itemsize
        + K * np_pad * w_t.dtype.itemsize
        + np_pad * b.dtype.itemsize
        + M * np_pad * jnp.dtype(out_dtype).itemsize
    )

    out = pl.pallas_call(
        _linear_kernel,
        out_shape=jax.ShapeDtypeStruct((M, np_pad), out_dtype),
        grid=grid,
        in_specs=[
            pl.BlockSpec((tm, K), lambda j, i: (i, 0)),   # x: stream over M
            pl.BlockSpec((K, tn), lambda j, i: (0, j)),   # W: constant over M
            pl.BlockSpec((1, tn), lambda j, i: (0, j)),   # bias
        ],
        out_specs=pl.BlockSpec((tm, tn), lambda j, i: (i, j)),
        compiler_params=pltpu.CompilerParams(
            dimension_semantics=("parallel", "parallel"),
            vmem_limit_bytes=vmem_limit,
        ),
        cost_estimate=pl.CostEstimate(
            flops=2 * M * K * np_pad,
            transcendentals=0,
            bytes_accessed=bytes_accessed,
        ),
    )(x, w_t, b)

    if n_out != np_pad:
        out = out[:, :n_out]
    return out


def linear_classifier(x, w_t, b, *, n_classes=None, compute_dtype=jnp.bfloat16,
                      tm=None, tn=None):
    """y = x @ w_t + b.

    x:   (batch, outplanes)
    w_t: (outplanes, n_classes_padded)  (transposed nn.Linear weight, may be
                                         pre-padded along N to a 128 multiple)
    b:   (1, n_classes_padded)
    n_classes: true number of classes (output is sliced to this width).
    """
    M, K = x.shape
    Nw = w_t.shape[1]
    n_out = int(n_classes) if n_classes is not None else Nw

    in_dtype = compute_dtype if compute_dtype is not None else x.dtype
    in_itemsize = jnp.dtype(in_dtype).itemsize
    out_itemsize = jnp.dtype(x.dtype).itemsize
    sublane = {1: 32, 2: 16}.get(in_itemsize, 8)

    tm_a, tn_a, np_pad, vmem_limit = _select_plan(
        M, K, Nw, in_itemsize, out_itemsize, sublane)
    if tn is not None:
        tn_a = _round_up(tn, 128)
        np_pad = _round_up(Nw, tn_a)
    if tm is not None:
        tm_a = _round_up(min(tm, _round_up(M, sublane)), sublane)

    return _linear_pallas(
        x, w_t, b,
        tm=tm_a, tn=tn_a, np_pad=np_pad, n_out=n_out,
        vmem_limit=vmem_limit, compute_dtype=compute_dtype)


class LinearClassifier:
    """JAX/Pallas mirror of the PyTorch LinearClassifier module."""

    def __init__(self, outplanes, n_classes, key, *, compute_dtype=jnp.bfloat16):
        kw, kb = jax.random.split(key)
        bound = 1.0 / (outplanes ** 0.5)
        # PyTorch weight is (n_classes, outplanes); we store the transpose.
        w_t = jax.random.uniform(kw, (outplanes, n_classes), jnp.float32,
                                 -bound, bound)
        b = jax.random.uniform(kb, (1, n_classes), jnp.float32, -bound, bound)

        self.n_classes = n_classes
        self.compute_dtype = compute_dtype

        # One-time hoisted work: lane-pad N to a 128 multiple and pre-cast the
        # weight to the MXU compute dtype (no per-call pad/cast HBM copies).
        np_full = _round_up(n_classes, 128)
        if np_full != n_classes:
            w_t = jnp.pad(w_t, ((0, 0), (0, np_full - n_classes)))
            b = jnp.pad(b, ((0, 0), (0, np_full - n_classes)))
        self.w_t = w_t.astype(compute_dtype) if compute_dtype is not None else w_t
        self.b = b  # bias stays f32; added in the f32 epilogue

    def __call__(self, x, num_batch=None):
        # num_batch is unused by the reference forward pass as well.
        return linear_classifier(x, self.w_t, self.b,
                                 n_classes=self.n_classes,
                                 compute_dtype=self.compute_dtype)


if __name__ == "__main__":
    key = jax.random.PRNGKey(0)
    k_in, k_param, k_in2, k_param2 = jax.random.split(key, 4)

    # --- Test 1: tiny shapes, weight-resident single-tile path --------------
    batch, outplanes, n_classes = 8, 32, 16
    x = jax.random.normal(k_in, (batch, outplanes), jnp.float32)
    model = LinearClassifier(outplanes, n_classes, k_param)

    y = model(x, num_batch=batch)
    jax.block_until_ready(y)

    # Reference matched to the kernel's compute path: bf16 inputs, f32 math.
    w_ref = model.w_t.astype(jnp.float32)[:, :n_classes]
    b_ref = model.b[:, :n_classes].astype(jnp.float32)
    x_bf = x.astype(jnp.bfloat16).astype(jnp.float32)
    y_ref = jnp.dot(x_bf, w_ref, precision=jax.lax.Precision.HIGHEST) + b_ref
    assert y.shape == (batch, n_classes)
    assert jnp.allclose(y, y_ref, atol=2e-3, rtol=2e-3), float(
        jnp.max(jnp.abs(y - y_ref)))

    # --- Test 2: misaligned shapes + forced N tiling -------------------------
    # Exercises the partial M edge block (no x padding), the lane-padded /
    # sliced N dimension, and the 2-D (N-outer, M-inner) grid.
    batch2, outplanes2, n_classes2 = 50, 72, 260
    x2 = jax.random.normal(k_in2, (batch2, outplanes2), jnp.float32)
    model2 = LinearClassifier(outplanes2, n_classes2, k_param2)

    y2 = linear_classifier(x2, model2.w_t, model2.b, n_classes=n_classes2,
                           compute_dtype=jnp.bfloat16, tm=32, tn=128)
    jax.block_until_ready(y2)

    w_ref2 = model2.w_t.astype(jnp.float32)[:, :n_classes2]
    b_ref2 = model2.b[:, :n_classes2].astype(jnp.float32)
    x2_bf = x2.astype(jnp.bfloat16).astype(jnp.float32)
    y2_ref = jnp.dot(x2_bf, w_ref2, precision=jax.lax.Precision.HIGHEST) + b_ref2
    assert y2.shape == (batch2, n_classes2)
    assert jnp.allclose(y2, y2_ref, atol=2e-3, rtol=2e-3), float(
        jnp.max(jnp.abs(y2 - y2_ref)))

    print("KERNEL_OK")
</pallas_src>

<mosaic_0001>
module attributes {stable_mosaic.version = 11 : i64} {
  func.func @_linear_kernel(%arg0: i32, %arg1: i32, %arg2: memref<16x32xbf16, #tpu.memory_space<vmem>>, %arg3: memref<32x128xbf16, #tpu.memory_space<vmem>>, %arg4: memref<1x128xf32, #tpu.memory_space<vmem>>, %arg5: memref<16x128xf32, #tpu.memory_space<vmem>>) attributes {dimension_semantics = [#tpu.dimension_semantics<parallel>, #tpu.dimension_semantics<parallel>], iteration_bounds = array<i64: 1, 1>, scalar_prefetch = 0 : i64, scratch_operands = 0 : i64, tpu.core_type = #tpu.core_type<tc>, window_params = [{transform_indices = @transform_0, window_bounds = array<i64: 16, 32>}, {transform_indices = @transform_1, window_bounds = array<i64: 32, 128>}, {transform_indices = @transform_2, window_bounds = array<i64: 1, 128>}, {transform_indices = @transform_3, window_bounds = array<i64: 16, 128>}]} {
    %c0 = arith.constant 0 : index
    %c0_0 = arith.constant 0 : index
    %0 = vector.load %arg2[%c0, %c0_0] : memref<16x32xbf16, #tpu.memory_space<vmem>>, vector<16x32xbf16>
    %c0_1 = arith.constant 0 : index
    %c0_2 = arith.constant 0 : index
    %1 = vector.load %arg3[%c0_1, %c0_2] : memref<32x128xbf16, #tpu.memory_space<vmem>>, vector<32x128xbf16>
    %cst = arith.constant dense<0.000000e+00> : vector<16x128xf32>
    %2 = tpu.matmul %0, %1, %cst {dimension_numbers = #tpu.dot_dimension_numbers<[1], [0], [0], [1], [0, 0, 1, 1], [], []>} : vector<16x32xbf16>, vector<32x128xbf16>, vector<16x128xf32> -> vector<16x128xf32>
    %c0_3 = arith.constant 0 : index
    %c0_4 = arith.constant 0 : index
    %3 = vector.load %arg4[%c0_3, %c0_4] : memref<1x128xf32, #tpu.memory_space<vmem>>, vector<1x128xf32>
    %4 = vector.broadcast %3 : vector<1x128xf32> to vector<16x128xf32>
    %5 = arith.addf %2, %4 : vector<16x128xf32>
    %c0_5 = arith.constant 0 : index
    %c0_6 = arith.constant 0 : index
    %6 = vector.load %arg5[%c0_5, %c0_6] : memref<16x128xf32, #tpu.memory_space<vmem>>, vector<16x128xf32>
    tpu.vector_store %arg5[%c0_5, %c0_6], %5 {strides = array<i32>} : memref<16x128xf32, #tpu.memory_space<vmem>>, vector<16x128xf32>,
    return
  }
  func.func @transform_0(%arg0: i32, %arg1: i32) -> (i32, i32) {
    %c0_i32 = arith.constant 0 : i32
    %c0_i32_0 = arith.constant 0 : i32
    return %arg1, %c0_i32 : i32, i32
  }
  func.func @transform_1(%arg0: i32, %arg1: i32) -> (i32, i32) {
    %c0_i32 = arith.constant 0 : i32
    %c0_i32_0 = arith.constant 0 : i32
    return %c0_i32, %arg0 : i32, i32
  }
  func.func @transform_2(%arg0: i32, %arg1: i32) -> (i32, i32) {
    %c0_i32 = arith.constant 0 : i32
    %c0_i32_0 = arith.constant 0 : i32
    return %c0_i32, %arg0 : i32, i32
  }
  func.func @transform_3(%arg0: i32, %arg1: i32) -> (i32, i32) {
    %c0_i32 = arith.constant 0 : i32
    return %arg1, %arg0 : i32, i32
  }
}

</mosaic_0001>

<llo_original>
// kernel: _linear_pallas.1
$region0: #{_linear_pallas.1}
  #allocation0 [shape = 'u32[]', space=smem, size = 0x4, offset = 0x4, fixed_abs, tag = 'smem constant byte address 0x4 - core index']
  #allocation1 [shape = 'u32[144,128]{1,0:T(1,128)}', space=vmem, size = 0x12000, scoped, tag = 'internal scratch']
  %s0 = inlined_call_operand.vmem [shape: bf16[8,32], index: 0, kind: input, shape index: {}]
  %s1 = inlined_call_operand.hbm [shape: bf16[32,128], index: 1, kind: input, shape index: {}]
  %s2 = inlined_call_operand.vmem [shape: f32[1,128], index: 2, kind: input, shape index: {}]
  %s3 = inlined_call_operand.hbm [shape: f32[8,128], index: 3, kind: output, shape index: {}]
  %s4 = sld [smem:[#allocation0]]
  $region26: #{_linear_pallas.1} parent=0
    _
  %s6 = ssub.s32 1, %s4
  %s7 = scalar_select 0, %s6, %s4
  $region1: #{_linear_pallas.1} parent=0
    #allocation2 [shape = 'u8[8192]{0}', space=vmem, size = 0x2000, scoped, tag = 'input window, operand 1, single buffered']
    #allocation3 [shape = 's32[1]{0}', space=sflag, size = 0x4, scoped, tag = 'scoped memory for _linear_pallas.1']
    #allocation4 [shape = 's32[1]{0}', space=sflag, size = 0x4, scoped, tag = 'scoped memory for _linear_pallas.1']
    #allocation5 [shape = 'u8[8192]{0}', space=vmem, size = 0x2000, scoped, tag = 'output window, operand 0, single buffered']
    %8 = vsyncpa [#allocation3], 0
    %9 = vsyncpa [#allocation4], 0
    // Predicated region
    $region2: #{_linear_pallas.1} parent=1 // pred_check
      _
    $region3: #{_linear_pallas.1} parent=1 // pred_check_branch
      %11 = sbr.rel (0) target = $region5
    $region4: #{_linear_pallas.1} parent=1 // pred_region
      _
    $region5: #{_linear_pallas.1} parent=1 // pred_fallthru
      _
    // Predicated region
    $region6: #{_linear_pallas.1} parent=1 // pred_check
      _
    $region7: #{_linear_pallas.1} parent=1 // pred_check_branch
      %13 = sbr.rel (0) target = $region9
    $region8: #{_linear_pallas.1} parent=1 // pred_region
      %s15 = ssub.s32 256, 256
      %16 = vsyncadd [#allocation3], %s15
      %s17 = sshll.u32 [#allocation2], 4
      %s18 = int_to_ptr.vmem [resolvable:$true] %s17
      %23 = dma.hbm_to_vmem [thread:$0]  %s1, 256, %s18, [#allocation3], 64, 64, 4
    $region9: #{_linear_pallas.1} parent=1 // pred_fallthru
      _
    // Predicated region
    $region10: #{_linear_pallas.1} parent=1 // pred_check
      _
    $region11: #{_linear_pallas.1} parent=1 // pred_check_branch
      %25 = sbr.rel (0) target = $region13
    $region12: #{_linear_pallas.1} parent=1 // pred_region
      _
    $region13: #{_linear_pallas.1} parent=1 // pred_fallthru
      _
    // Predicated region
    $region14: #{_linear_pallas.1} parent=1 // pred_check
      _
    $region15: #{_linear_pallas.1} parent=1 // pred_check_branch
      %27 = sbr.rel (0) target = $region17
    $region16: #{_linear_pallas.1} parent=1 // pred_region
      %28 = dma.done [#allocation3], 256
    $region17: #{_linear_pallas.1} parent=1 // pred_fallthru
      _
    %v30 = vld [vmem:[%s0] sm:$0xf]
    %v31 = vld [vmem:[%s0 + $0x4] sm:$0xf]
    %v32 = vld [vmem:[#allocation2] sm:$0xf]
    %v33 = vld [vmem:[#allocation2 + $0x4] sm:$0xf]
    %v34 = vld [vmem:[#allocation2 + $0x8] sm:$0xf]
    %v35 = vld [vmem:[#allocation2 + $0xc] sm:$0xf]
    %v36 = vld [vmem:[%s2] sm:$0x1]
    %v38 = vlaneseq
    %v39 = vshrl.u32 %v38, 7
    %v40 = vsub.s32 0, %v39
    %v41 = vrot.slane %v36, %v40
    %v45 = vunpack.c.l.b16 %v30
    %v46 = vunpack.c.l.b16 %v31
    %v47 = vpack.c.b16 %v46, %v45
    %v52 = vunpack.c.l.b16 %v32
    %v53 = vunpack.c.l.b16 %v33
    %v54 = vunpack.c.l.b16 %v34
    %v55 = vunpack.c.l.b16 %v35
    %v56 = vpack.c.b16 %v53, %v52
    %v57 = vpack.c.b16 %v55, %v54
    %vm60 = vcmask 261120
    %v62 = vsel %vm60, %v47, 0
    %64 = vmatprep.subr.bf16.mxu0 0
    %65 = vmatpush1.bf16.msra.mxu0 0
    %66 = vmatprep.subr.bf16.mxu0 0
    %67 = vmatpush1.bf16.msra.mxu0 0
    %68 = vmatprep.subr.bf16.mxu0 0
    %69 = vmatpush1.bf16.msra.mxu0 0
    %70 = vmatprep.subr.bf16.mxu0 0
    %71 = vmatpush1.bf16.msra.mxu0 0
    %72 = vmatprep.subr.bf16.mxu0 0
    %73 = vmatpush1.bf16.msra.mxu0 0
    %74 = vmatprep.subr.bf16.mxu0 0
    %75 = vmatpush1.bf16.msra.mxu0 0
    %76 = vmatprep.subr.bf16.mxu0 0
    %77 = vmatpush1.bf16.msra.mxu0 %v57
    %78 = vmatprep.subr.bf16.mxu0 0
    %79 = vmatpush1.bf16.msra.mxu0 %v56
    %80 = vmatprep.subr.bf16.mxu0 0
    %81 = vmatpush2.bf16.msra.mxu0 0
    %82 = vmatprep.subr.bf16.mxu0 0
    %83 = vmatpush2.bf16.msra.mxu0 0
    %84 = vmatprep.subr.bf16.mxu0 0
    %85 = vmatpush2.bf16.msra.mxu0 0
    %86 = vmatprep.subr.bf16.mxu0 0
    %87 = vmatpush2.bf16.msra.mxu0 0
    %88 = vmatprep.subr.bf16.mxu0 0
    %89 = vmatpush2.bf16.msra.mxu0 0
    %90 = vmatprep.subr.bf16.mxu0 0
    %91 = vmatpush2.bf16.msra.mxu0 0
    %92 = vmatprep.subr.bf16.mxu0 0
    %93 = vmatpush2.bf16.msra.mxu0 0
    %94 = vmatprep.subr.bf16.mxu0 0
    %95 = vmatpush2.bf16.msra.mxu0 0
    %96 = vmatprep.mubr.bf16.mxu0 0
    %97 = vmatmul.mubr.bf16.gmra.mxu0 %v62
    %v98 = vpop.f32.mrf.mxu0
    %v99 = vadd.f32 %v41, %v98
    %v100 = vpop.f32.mrf.mxu0
    %v101 = vpop.f32.mrf.mxu0
    %v102 = vadd.f32 %v41, %v101
    %v103 = vpop.f32.mrf.mxu0
    %104 = vdwg.mxu0
    %105 = vst [vmem:[#allocation5] sm:$0xff] %v99
    %106 = vst [vmem:[#allocation5 + $0x8] sm:$0xff] %v102
    // Predicated region
    $region18: #{_linear_pallas.1} parent=1 // pred_check
      _
    $region19: #{_linear_pallas.1} parent=1 // pred_check_branch
      %108 = sbr.rel (0) target = $region21
    $region20: #{_linear_pallas.1} parent=1 // pred_region
      %s110 = ssub.s32 256, 128
      %111 = vsyncadd [#allocation4], %s110
      %s112 = sshll.u32 [#allocation5], 4
      %s113 = int_to_ptr.vmem [resolvable:$true] %s112
      %118 = dma.vmem_to_hbm [thread:$0]  %s113, 128, %s3, [#allocation4], 128, 128, 8
    $region21: #{_linear_pallas.1} parent=1 // pred_fallthru
      _
    // Predicated region
    $region22: #{_linear_pallas.1} parent=1 // pred_check
      _
    $region23: #{_linear_pallas.1} parent=1 // pred_check_branch
      %120 = sbr.rel (0) target = $region25
    $region24: #{_linear_pallas.1} parent=1 // pred_region
      %121 = dma.done [#allocation4], 256
    $region25: #{_linear_pallas.1} parent=1 // pred_fallthru
      _
    %122 = vsyncpa [#allocation3], 1
    %123 = vsyncpa [#allocation4], 1

</llo_original>
